<compile_context>
chip_gen: v7x
topology: tpu7x:2x2x1
jax: 0.10.0
libtpu: 0.0.40
codegen_flags: <defaults>
</compile_context>

<pallas_src>
import jax
import jax.numpy as jnp
from jax import lax
from jax.experimental import pallas as pl
from jax.experimental.pallas import tpu as pltpu

H1, H2 = 500, 300        # logical (PyTorch) hidden sizes
H1P, H2P = 512, 384      # lane-padded hidden sizes (multiples of 128)
OUTP = 128               # lane-dense padded fc3 output width (real value is column 0)
BN_EPS = 1e-5


def critic_kernel(state_ref, action_ref,
                  w1_ref, gamma_ref, beta_ref,
                  w2s_ref, w2a_ref, b2_ref,
                  w3_ref, b3_ref,
                  out_ref):
    # fc1: (B, S)bf16 @ (S, 512)bf16 -> f32.  b1 is folded out (BN cancels it).
    h1 = jnp.dot(state_ref[...], w1_ref[...],
                 preferred_element_type=jnp.float32)

    # BatchNorm1d, training mode (biased batch variance), one-pass stats in f32.
    inv_b = 1.0 / h1.shape[0]
    mean = jnp.sum(h1, axis=0, keepdims=True) * inv_b
    ex2 = jnp.sum(h1 * h1, axis=0, keepdims=True) * inv_b
    var = ex2 - mean * mean
    x_state = jnp.maximum(
        (h1 - mean) * lax.rsqrt(var + BN_EPS) * gamma_ref[...] + beta_ref[...],
        0.0)                                            # relu; padded cols stay 0

    # fc2 on cat([x_state, action]) == x_state @ W2s + action @ W2a  (bf16 MXU, f32 acc)
    h2 = (jnp.dot(x_state.astype(jnp.bfloat16), w2s_ref[...],
                  preferred_element_type=jnp.float32)
          + jnp.dot(action_ref[...], w2a_ref[...],
                    preferred_element_type=jnp.float32)
          + b2_ref[...])
    h2 = jnp.maximum(h2, 0.0)                           # relu; padded cols stay 0

    # fc3: lane-dense padded output (B, 128); only column 0 is meaningful.
    out_ref[...] = (jnp.dot(h2.astype(jnp.bfloat16), w3_ref[...],
                            preferred_element_type=jnp.float32)
                    + b3_ref[0, 0])


def critic_forward(state, action, kp):
    """state: (B, state_size) f32, action: (B, action_size) f32."""
    B = state.shape[0]
    state_bf = state.astype(jnp.bfloat16)
    action_bf = action.astype(jnp.bfloat16)

    flops = 2 * B * (state.shape[1] * H1 + (H1 + action.shape[1]) * H2 + H2)
    bytes_accessed = int(
        state_bf.size * 2 + action_bf.size * 2
        + sum(int(v.size) * v.dtype.itemsize for v in kp.values())
        + B * OUTP * 4)

    vmem = pl.BlockSpec(memory_space=pltpu.MemorySpace.VMEM)
    smem = pl.BlockSpec(memory_space=pltpu.MemorySpace.SMEM)

    out = pl.pallas_call(
        critic_kernel,
        out_shape=jax.ShapeDtypeStruct((B, OUTP), jnp.float32),
        in_specs=[vmem, vmem,                 # state, action
                  vmem, vmem, vmem,           # w1, gamma, beta
                  vmem, vmem, vmem,           # w2s, w2a, b2
                  vmem, smem],                # w3, b3 (scalar in SMEM)
        out_specs=vmem,
        compiler_params=pltpu.CompilerParams(vmem_limit_bytes=32 * 1024 * 1024),
        cost_estimate=pl.CostEstimate(flops=flops, transcendentals=H1P,
                                      bytes_accessed=bytes_accessed),
    )(state_bf, action_bf,
      kp["w1"], kp["gamma"], kp["beta"],
      kp["w2s"], kp["w2a"], kp["b2"],
      kp["w3"], kp["b3"])
    return out[:, :1]


def init_params(key, state_size, action_size):
    """Logical f32 params mirroring the module (weights pre-transposed to
    (in_features, out_features)).  hidden_init quirk kept: fan_in = out_features."""
    ks = jax.random.split(key, 8)
    lim1 = 1.0 / jnp.sqrt(jnp.float32(H1))        # fc1: weight.size(0) = 500
    lim2 = 1.0 / jnp.sqrt(jnp.float32(H2))        # fc2: weight.size(0) = 300
    lim3 = 0.003

    w1 = jax.random.uniform(ks[0], (state_size, H1), jnp.float32, -lim1, lim1)
    b1 = jax.random.uniform(ks[1], (1, H1), jnp.float32,
                            -1.0 / jnp.sqrt(jnp.float32(state_size)),
                            1.0 / jnp.sqrt(jnp.float32(state_size)))
    w2 = jax.random.uniform(ks[2], (H1 + action_size, H2), jnp.float32, -lim2, lim2)
    b2 = jax.random.uniform(ks[3], (1, H2), jnp.float32,
                            -1.0 / jnp.sqrt(jnp.float32(H1 + action_size)),
                            1.0 / jnp.sqrt(jnp.float32(H1 + action_size)))
    w3 = jax.random.uniform(ks[4], (H2, 1), jnp.float32, -lim3, lim3)
    b3 = jax.random.uniform(ks[5], (1, 1), jnp.float32,
                            -1.0 / jnp.sqrt(jnp.float32(H2)),
                            1.0 / jnp.sqrt(jnp.float32(H2)))
    return {
        "w1": w1, "b1": b1,
        "gamma": jnp.ones((1, H1), jnp.float32),
        "beta": jnp.zeros((1, H1), jnp.float32),
        "w2s": w2[:H1, :], "w2a": w2[H1:, :], "b2": b2,
        "w3": w3, "b3": b3,
    }


def prepare_kernel_params(p):
    """Pad feature dims to lane multiples (zero padding) and cast MXU weights to bf16."""
    def padc(x, n):  # pad last dim (lanes) with zeros
        return jnp.pad(x, ((0, 0), (0, n - x.shape[1])))

    def padr(x, n):  # pad first dim with zeros
        return jnp.pad(x, ((0, n - x.shape[0]), (0, 0)))

    return {
        # b1 intentionally dropped: training-mode BN cancels a per-feature shift.
        "w1": padc(p["w1"], H1P).astype(jnp.bfloat16),
        "gamma": padc(p["gamma"], H1P),   # padded with ZEROS -> padded cols stay 0
        "beta": padc(p["beta"], H1P),
        "w2s": padc(padr(p["w2s"], H1P), H2P).astype(jnp.bfloat16),
        "w2a": padc(p["w2a"], H2P).astype(jnp.bfloat16),
        "b2": padc(p["b2"], H2P),
        "w3": padc(padr(p["w3"], H2P), OUTP).astype(jnp.bfloat16),
        "b3": p["b3"],                    # (1,1) f32 scalar -> SMEM
    }


def critic_reference(state, action, p):
    """Pure-JAX f32 reference matching the PyTorch forward exactly (b1 included)."""
    h1 = state @ p["w1"] + p["b1"]
    mean = jnp.mean(h1, axis=0, keepdims=True)
    var = jnp.mean((h1 - mean) ** 2, axis=0, keepdims=True)
    xs = jnp.maximum((h1 - mean) / jnp.sqrt(var + BN_EPS) * p["gamma"] + p["beta"], 0.0)
    h2 = jnp.maximum(xs @ p["w2s"] + action @ p["w2a"] + p["b2"], 0.0)
    return h2 @ p["w3"] + p["b3"]


if __name__ == "__main__":
    state_size, action_size, batch = 32, 8, 8
    key = jax.random.PRNGKey(0)
    k_state, k_action, k_params = jax.random.split(key, 3)

    state = jax.random.normal(k_state, (batch, state_size), jnp.float32)
    action = jax.random.normal(k_action, (batch, action_size), jnp.float32)
    params = init_params(k_params, state_size, action_size)
    kparams = prepare_kernel_params(params)

    out = critic_forward(state, action, kparams)
    out = jax.block_until_ready(out)

    ref = critic_reference(state, action, params)
    assert out.shape == (batch, 1)
    # bf16 MXU operands (f32 accumulation) -> loosened tolerance vs f32 reference.
    assert jnp.allclose(out, ref, atol=1e-2, rtol=5e-2), (
        f"max abs diff {jnp.max(jnp.abs(out - ref))}")

    print("KERNEL_OK")
</pallas_src>

<mosaic_0001>
module attributes {stable_mosaic.version = 11 : i64} {
  func.func @critic_kernel(%arg0: memref<8x32xbf16, #tpu.memory_space<vmem>>, %arg1: memref<8x8xbf16, #tpu.memory_space<vmem>>, %arg2: memref<32x512xbf16, #tpu.memory_space<vmem>>, %arg3: memref<1x512xf32, #tpu.memory_space<vmem>>, %arg4: memref<1x512xf32, #tpu.memory_space<vmem>>, %arg5: memref<512x384xbf16, #tpu.memory_space<vmem>>, %arg6: memref<8x384xbf16, #tpu.memory_space<vmem>>, %arg7: memref<1x384xf32, #tpu.memory_space<vmem>>, %arg8: memref<384x128xbf16, #tpu.memory_space<vmem>>, %arg9: memref<1x1xf32, #tpu.memory_space<smem>>, %arg10: memref<8x128xf32, #tpu.memory_space<vmem>>) attributes {dimension_semantics = [], scalar_prefetch = 0 : i64, scratch_operands = 0 : i64, tpu.core_type = #tpu.core_type<tc>} {
    %c0 = arith.constant 0 : index
    %c0_0 = arith.constant 0 : index
    %0 = vector.load %arg0[%c0, %c0_0] : memref<8x32xbf16, #tpu.memory_space<vmem>>, vector<8x32xbf16>
    %c0_1 = arith.constant 0 : index
    %c0_2 = arith.constant 0 : index
    %1 = vector.load %arg2[%c0_1, %c0_2] : memref<32x512xbf16, #tpu.memory_space<vmem>>, vector<32x512xbf16>
    %cst = arith.constant dense<0.000000e+00> : vector<8x512xf32>
    %2 = tpu.matmul %0, %1, %cst {dimension_numbers = #tpu.dot_dimension_numbers<[1], [0], [0], [1], [0, 0, 1, 1], [], []>} : vector<8x32xbf16>, vector<32x512xbf16>, vector<8x512xf32> -> vector<8x512xf32>
    %cst_3 = arith.constant dense<0.000000e+00> : vector<512xf32>
    %3 = vector.multi_reduction <add>, %2, %cst_3 [0] : vector<8x512xf32> to vector<512xf32>
    %4 = vector.shape_cast %3 : vector<512xf32> to vector<1x512xf32>
    %cst_4 = arith.constant 1.250000e-01 : f32
    %5 = vector.broadcast %cst_4 : f32 to vector<1x512xf32>
    %6 = arith.mulf %4, %5 : vector<1x512xf32>
    %7 = arith.mulf %2, %2 : vector<8x512xf32>
    %cst_5 = arith.constant dense<0.000000e+00> : vector<512xf32>
    %8 = vector.multi_reduction <add>, %7, %cst_5 [0] : vector<8x512xf32> to vector<512xf32>
    %9 = vector.shape_cast %8 : vector<512xf32> to vector<1x512xf32>
    %cst_6 = arith.constant 1.250000e-01 : f32
    %10 = vector.broadcast %cst_6 : f32 to vector<1x512xf32>
    %11 = arith.mulf %9, %10 : vector<1x512xf32>
    %12 = arith.mulf %6, %6 : vector<1x512xf32>
    %13 = arith.subf %11, %12 : vector<1x512xf32>
    %14 = vector.broadcast %6 : vector<1x512xf32> to vector<8x512xf32>
    %15 = arith.subf %2, %14 : vector<8x512xf32>
    %cst_7 = arith.constant 9.99999974E-6 : f32
    %16 = vector.broadcast %cst_7 : f32 to vector<1x512xf32>
    %17 = arith.addf %13, %16 : vector<1x512xf32>
    %18 = math.rsqrt %17 : vector<1x512xf32>
    %19 = vector.broadcast %18 : vector<1x512xf32> to vector<8x512xf32>
    %20 = arith.mulf %15, %19 : vector<8x512xf32>
    %c0_8 = arith.constant 0 : index
    %c0_9 = arith.constant 0 : index
    %21 = vector.load %arg3[%c0_8, %c0_9] : memref<1x512xf32, #tpu.memory_space<vmem>>, vector<1x512xf32>
    %22 = vector.broadcast %21 : vector<1x512xf32> to vector<8x512xf32>
    %23 = arith.mulf %20, %22 : vector<8x512xf32>
    %c0_10 = arith.constant 0 : index
    %c0_11 = arith.constant 0 : index
    %24 = vector.load %arg4[%c0_10, %c0_11] : memref<1x512xf32, #tpu.memory_space<vmem>>, vector<1x512xf32>
    %25 = vector.broadcast %24 : vector<1x512xf32> to vector<8x512xf32>
    %26 = arith.addf %23, %25 : vector<8x512xf32>
    %cst_12 = arith.constant 0.000000e+00 : f32
    %27 = vector.broadcast %cst_12 : f32 to vector<8x512xf32>
    %28 = arith.maximumf %26, %27 : vector<8x512xf32>
    %29 = arith.truncf %28 : vector<8x512xf32> to vector<8x512xbf16>
    %c0_13 = arith.constant 0 : index
    %c0_14 = arith.constant 0 : index
    %30 = vector.load %arg5[%c0_13, %c0_14] : memref<512x384xbf16, #tpu.memory_space<vmem>>, vector<512x384xbf16>
    %cst_15 = arith.constant dense<0.000000e+00> : vector<8x384xf32>
    %31 = tpu.matmul %29, %30, %cst_15 {dimension_numbers = #tpu.dot_dimension_numbers<[1], [0], [0], [1], [0, 0, 1, 1], [], []>} : vector<8x512xbf16>, vector<512x384xbf16>, vector<8x384xf32> -> vector<8x384xf32>
    %c0_16 = arith.constant 0 : index
    %c0_17 = arith.constant 0 : index
    %32 = vector.load %arg1[%c0_16, %c0_17] : memref<8x8xbf16, #tpu.memory_space<vmem>>, vector<8x8xbf16>
    %c0_18 = arith.constant 0 : index
    %c0_19 = arith.constant 0 : index
    %33 = vector.load %arg6[%c0_18, %c0_19] : memref<8x384xbf16, #tpu.memory_space<vmem>>, vector<8x384xbf16>
    %cst_20 = arith.constant dense<0.000000e+00> : vector<8x384xf32>
    %34 = tpu.matmul %32, %33, %cst_20 {dimension_numbers = #tpu.dot_dimension_numbers<[1], [0], [0], [1], [0, 0, 1, 1], [], []>} : vector<8x8xbf16>, vector<8x384xbf16>, vector<8x384xf32> -> vector<8x384xf32>
    %35 = arith.addf %31, %34 : vector<8x384xf32>
    %c0_21 = arith.constant 0 : index
    %c0_22 = arith.constant 0 : index
    %36 = vector.load %arg7[%c0_21, %c0_22] : memref<1x384xf32, #tpu.memory_space<vmem>>, vector<1x384xf32>
    %37 = vector.broadcast %36 : vector<1x384xf32> to vector<8x384xf32>
    %38 = arith.addf %35, %37 : vector<8x384xf32>
    %cst_23 = arith.constant 0.000000e+00 : f32
    %39 = vector.broadcast %cst_23 : f32 to vector<8x384xf32>
    %40 = arith.maximumf %38, %39 : vector<8x384xf32>
    %41 = arith.truncf %40 : vector<8x384xf32> to vector<8x384xbf16>
    %c0_24 = arith.constant 0 : index
    %c0_25 = arith.constant 0 : index
    %42 = vector.load %arg8[%c0_24, %c0_25] : memref<384x128xbf16, #tpu.memory_space<vmem>>, vector<384x128xbf16>
    %cst_26 = arith.constant dense<0.000000e+00> : vector<8x128xf32>
    %43 = tpu.matmul %41, %42, %cst_26 {dimension_numbers = #tpu.dot_dimension_numbers<[1], [0], [0], [1], [0, 0, 1, 1], [], []>} : vector<8x384xbf16>, vector<384x128xbf16>, vector<8x128xf32> -> vector<8x128xf32>
    %c0_27 = arith.constant 0 : index
    %c0_28 = arith.constant 0 : index
    %44 = memref.load %arg9[%c0_27, %c0_28] : memref<1x1xf32, #tpu.memory_space<smem>>
    %45 = vector.broadcast %44 : f32 to vector<8x128xf32>
    %46 = arith.addf %43, %45 : vector<8x128xf32>
    %c0_29 = arith.constant 0 : index
    %c0_30 = arith.constant 0 : index
    %47 = vector.load %arg10[%c0_29, %c0_30] : memref<8x128xf32, #tpu.memory_space<vmem>>, vector<8x128xf32>
    tpu.vector_store %arg10[%c0_29, %c0_30], %46 {strides = array<i32>} : memref<8x128xf32, #tpu.memory_space<vmem>>, vector<8x128xf32>,
    return
  }
}

</mosaic_0001>

<llo_original>
// kernel: tpu_custom_call.1
$region0: #{tpu_custom_call.1}
  #allocation0 [shape = 'u32[]', space=smem, size = 0x4, offset = 0x4, fixed_abs, tag = 'smem constant byte address 0x4 - core index']
  #allocation1 [shape = 'u32[144,128]{1,0:T(1,128)}', space=vmem, size = 0x12000, scoped, tag = 'internal scratch']
  #allocation2 [shape = 'f32[1,1]{1,0:T(1,128)S(6)}', space=smem, size = 0x200, scoped, tag = 'scoped memory for tpu_custom_call.1']
  %s0 = inlined_call_operand.hbm [shape: bf16[8,32], index: 0, kind: input, shape index: {}]
  %s1 = inlined_call_operand.vmem [shape: bf16[8,8], index: 1, kind: input, shape index: {}]
  %s2 = inlined_call_operand.hbm [shape: bf16[32,512], index: 2, kind: input, shape index: {}]
  %s3 = inlined_call_operand.vmem [shape: f32[1,512], index: 3, kind: input, shape index: {}]
  %s4 = inlined_call_operand.hbm [shape: f32[1,512], index: 4, kind: input, shape index: {}]
  %s5 = inlined_call_operand.hbm [shape: bf16[512,384], index: 5, kind: input, shape index: {}]
  %s6 = inlined_call_operand.vmem [shape: bf16[8,384], index: 6, kind: input, shape index: {}]
  %s7 = inlined_call_operand.vmem [shape: f32[1,384], index: 7, kind: input, shape index: {}]
  %s8 = inlined_call_operand.hbm [shape: bf16[384,128], index: 8, kind: input, shape index: {}]
  %s9 = inlined_call_operand.<no memory space> [shape: f32[1,1], index: 9, kind: input, shape index: {}]
  %s10 = inlined_call_operand.hbm [shape: f32[8,128], index: 10, kind: output, shape index: {}]
  %s11 = sld [smem:[#allocation0]]
  $region70: #{tpu_custom_call.1} parent=0
    _
  %s13 = ssub.s32 1, %s11
  %s14 = scalar_select 0, %s13, %s11
  %15 = sst [smem:[#allocation2]] %s9
  $region1: #{tpu_custom_call.1} parent=0
    #allocation3 [shape = 'u8[2048]{0}', space=vmem, size = 0x800, scoped, tag = 'input window, operand 0, single buffered']
    #allocation4 [shape = 's32[1]{0}', space=sflag, size = 0x4, scoped, tag = 'scoped memory for tpu_custom_call.1']
    #allocation5 [shape = 's32[1]{0}', space=sflag, size = 0x4, scoped, tag = 'scoped memory for tpu_custom_call.1']
    #allocation6 [shape = 'u8[32768]{0}', space=vmem, size = 0x8000, scoped, tag = 'input window, operand 2, single buffered']
    #allocation7 [shape = 's32[1]{0}', space=sflag, size = 0x4, scoped, tag = 'scoped memory for tpu_custom_call.1']
    #allocation8 [shape = 'u8[2048]{0}', space=vmem, size = 0x800, scoped, tag = 'input window, operand 4, single buffered']
    #allocation9 [shape = 'u8[393216]{0}', space=vmem, size = 0x60000, scoped, tag = 'input window, operand 5, single buffered']
    #allocation10 [shape = 's32[1]{0}', space=sflag, size = 0x4, scoped, tag = 'scoped memory for tpu_custom_call.1']
    #allocation11 [shape = 'u8[98304]{0}', space=vmem, size = 0x18000, scoped, tag = 'input window, operand 8, single buffered']
    #allocation12 [shape = 'u8[4096]{0}', space=vmem, size = 0x1000, scoped, tag = 'output window, operand 0, single buffered']
    %16 = vsyncpa [#allocation4], 0
    %17 = vsyncpa [#allocation7], 0
    %18 = vsyncpa [#allocation10], 0
    %19 = vsyncpa [#allocation5], 0
    // Predicated region
    $region2: #{tpu_custom_call.1} parent=1 // pred_check
      _
    $region3: #{tpu_custom_call.1} parent=1 // pred_check_branch
      %21 = sbr.rel (0) target = $region5
    $region4: #{tpu_custom_call.1} parent=1 // pred_region
      %s23 = ssub.s32 64, 64
      %24 = vsyncadd [#allocation4], %s23
      %s26 = sshll.u32 [#allocation3], 4
      %s27 = int_to_ptr.vmem [resolvable:$true] %s26
      %29 = dma.hbm_to_vmem [thread:$0]  %s0, 64, %s27, [#allocation4]
    $region5: #{tpu_custom_call.1} parent=1 // pred_fallthru
      _
    // Predicated region
    $region6: #{tpu_custom_call.1} parent=1 // pred_check
      _
    $region7: #{tpu_custom_call.1} parent=1 // pred_check_branch
      %31 = sbr.rel (0) target = $region9
    $region8: #{tpu_custom_call.1} parent=1 // pred_region
      _
    $region9: #{tpu_custom_call.1} parent=1 // pred_fallthru
      _
    // Predicated region
    $region10: #{tpu_custom_call.1} parent=1 // pred_check
      _
    $region11: #{tpu_custom_call.1} parent=1 // pred_check_branch
      %33 = sbr.rel (0) target = $region13
    $region12: #{tpu_custom_call.1} parent=1 // pred_region
      %s35 = ssub.s32 1024, 1024
      %36 = vsyncadd [#allocation7], %s35
      %s37 = sshll.u32 [#allocation6], 4
      %s38 = int_to_ptr.vmem [resolvable:$true] %s37
      %43 = dma.hbm_to_vmem [thread:$0]  %s2, 1024, %s38, [#allocation7], 256, 256, 16
    $region13: #{tpu_custom_call.1} parent=1 // pred_fallthru
      _
    // Predicated region
    $region14: #{tpu_custom_call.1} parent=1 // pred_check
      _
    $region15: #{tpu_custom_call.1} parent=1 // pred_check_branch
      %45 = sbr.rel (0) target = $region17
    $region16: #{tpu_custom_call.1} parent=1 // pred_region
      _
    $region17: #{tpu_custom_call.1} parent=1 // pred_fallthru
      _
    // Predicated region
    $region18: #{tpu_custom_call.1} parent=1 // pred_check
      _
    $region19: #{tpu_custom_call.1} parent=1 // pred_check_branch
      %47 = sbr.rel (0) target = $region21
    $region20: #{tpu_custom_call.1} parent=1 // pred_region
      %s49 = ssub.s32 64, 64
      %50 = vsyncadd [#allocation7], %s49
      %s52 = sshll.u32 [#allocation8], 4
      %s53 = int_to_ptr.vmem [resolvable:$true] %s52
      %55 = dma.hbm_to_vmem [thread:$0]  %s4, 64, %s53, [#allocation7]
    $region21: #{tpu_custom_call.1} parent=1 // pred_fallthru
      _
    // Predicated region
    $region22: #{tpu_custom_call.1} parent=1 // pred_check
      _
    $region23: #{tpu_custom_call.1} parent=1 // pred_check_branch
      %57 = sbr.rel (0) target = $region25
    $region24: #{tpu_custom_call.1} parent=1 // pred_region
      %s59 = ssub.s32 12288, 12288
      %60 = vsyncadd [#allocation10], %s59
      %s61 = sshll.u32 [#allocation9], 4
      %s62 = int_to_ptr.vmem [resolvable:$true] %s61
      %67 = dma.hbm_to_vmem [thread:$0]  %s5, 12288, %s62, [#allocation10], 192, 192, 12
    $region25: #{tpu_custom_call.1} parent=1 // pred_fallthru
      _
    // Predicated region
    $region26: #{tpu_custom_call.1} parent=1 // pred_check
      _
    $region27: #{tpu_custom_call.1} parent=1 // pred_check_branch
      %69 = sbr.rel (0) target = $region29
    $region28: #{tpu_custom_call.1} parent=1 // pred_region
      _
    $region29: #{tpu_custom_call.1} parent=1 // pred_fallthru
      _
    // Predicated region
    $region30: #{tpu_custom_call.1} parent=1 // pred_check
      _
    $region31: #{tpu_custom_call.1} parent=1 // pred_check_branch
      %71 = sbr.rel (0) target = $region33
    $region32: #{tpu_custom_call.1} parent=1 // pred_region
      _
    $region33: #{tpu_custom_call.1} parent=1 // pred_fallthru
      _
    // Predicated region
    $region34: #{tpu_custom_call.1} parent=1 // pred_check
      _
    $region35: #{tpu_custom_call.1} parent=1 // pred_check_branch
      %73 = sbr.rel (0) target = $region37
    $region36: #{tpu_custom_call.1} parent=1 // pred_region
      %s75 = ssub.s32 3072, 3072
      %76 = vsyncadd [#allocation10], %s75
      %s77 = sshll.u32 [#allocation11], 4
      %s78 = int_to_ptr.vmem [resolvable:$true] %s77
      %83 = dma.hbm_to_vmem [thread:$0]  %s8, 3072, %s78, [#allocation10], 64, 64, 4
    $region37: #{tpu_custom_call.1} parent=1 // pred_fallthru
      _
    // Predicated region
    $region38: #{tpu_custom_call.1} parent=1 // pred_check
      _
    $region39: #{tpu_custom_call.1} parent=1 // pred_check_branch
      %85 = sbr.rel (0) target = $region41
    $region40: #{tpu_custom_call.1} parent=1 // pred_region
      _
    $region41: #{tpu_custom_call.1} parent=1 // pred_fallthru
      _
    // Predicated region
    $region42: #{tpu_custom_call.1} parent=1 // pred_check
      _
    $region43: #{tpu_custom_call.1} parent=1 // pred_check_branch
      %87 = sbr.rel (0) target = $region45
    $region44: #{tpu_custom_call.1} parent=1 // pred_region
      %88 = dma.done [#allocation4], 64
    $region45: #{tpu_custom_call.1} parent=1 // pred_fallthru
      _
    // Predicated region
    $region46: #{tpu_custom_call.1} parent=1 // pred_check
      _
    $region47: #{tpu_custom_call.1} parent=1 // pred_check_branch
      %90 = sbr.rel (0) target = $region49
    $region48: #{tpu_custom_call.1} parent=1 // pred_region
      %91 = dma.done [#allocation7], 1024
    $region49: #{tpu_custom_call.1} parent=1 // pred_fallthru
      _
    // Predicated region
    $region50: #{tpu_custom_call.1} parent=1 // pred_check
      _
    $region51: #{tpu_custom_call.1} parent=1 // pred_check_branch
      %93 = sbr.rel (0) target = $region53
    $region52: #{tpu_custom_call.1} parent=1 // pred_region
      %94 = dma.done [#allocation7], 64
    $region53: #{tpu_custom_call.1} parent=1 // pred_fallthru
      _
    // Predicated region
    $region54: #{tpu_custom_call.1} parent=1 // pred_check
      _
    $region55: #{tpu_custom_call.1} parent=1 // pred_check_branch
      %96 = sbr.rel (0) target = $region57
    $region56: #{tpu_custom_call.1} parent=1 // pred_region
      %97 = dma.done [#allocation10], 12288
    $region57: #{tpu_custom_call.1} parent=1 // pred_fallthru
      _
    // Predicated region
    $region58: #{tpu_custom_call.1} parent=1 // pred_check
      _
    $region59: #{tpu_custom_call.1} parent=1 // pred_check_branch
      %99 = sbr.rel (0) target = $region61
    $region60: #{tpu_custom_call.1} parent=1 // pred_region
      %100 = dma.done [#allocation10], 3072
    $region61: #{tpu_custom_call.1} parent=1 // pred_fallthru
      _
    %v102 = vld [vmem:[#allocation3] sm:$0xf]
    %v103 = vld [vmem:[#allocation6] sm:$0xff]
    %v104 = vld [vmem:[#allocation6 + $0x8] sm:$0xff]
    %v105 = vld [vmem:[#allocation6 + $0x10] sm:$0xff]
    %v106 = vld [vmem:[#allocation6 + $0x18] sm:$0xff]
    %v107 = vld [vmem:[#allocation6 + $0x20] sm:$0xff]
    %v108 = vld [vmem:[#allocation6 + $0x28] sm:$0xff]
    %v109 = vld [vmem:[#allocation6 + $0x30] sm:$0xff]
    %v110 = vld [vmem:[#allocation6 + $0x38] sm:$0xff]
    %v119 = vunpack.c.l.b16 %v103
    %v120 = vunpack.c.h.b16 %v103
    %v121 = vunpack.c.l.b16 %v104
    %v122 = vunpack.c.h.b16 %v104
    %v123 = vunpack.c.l.b16 %v105
    %v124 = vunpack.c.h.b16 %v105
    %v125 = vunpack.c.l.b16 %v106
    %v126 = vunpack.c.h.b16 %v106
    %v127 = vunpack.c.l.b16 %v107
    %v128 = vunpack.c.h.b16 %v107
    %v129 = vunpack.c.l.b16 %v108
    %v130 = vunpack.c.h.b16 %v108
    %v131 = vunpack.c.l.b16 %v109
    %v132 = vunpack.c.h.b16 %v109
    %v133 = vunpack.c.l.b16 %v110
    %v134 = vunpack.c.h.b16 %v110
    %v135 = vpack.c.b16 %v123, %v119
    %v136 = vpack.c.b16 %v124, %v120
    %v137 = vpack.c.b16 %v125, %v121
    %v138 = vpack.c.b16 %v126, %v122
    %v139 = vpack.c.b16 %v131, %v127
    %v140 = vpack.c.b16 %v132, %v128
    %v141 = vpack.c.b16 %v133, %v129
    %v142 = vpack.c.b16 %v134, %v130
    %vm151 = vcmask 261120
    %v153 = vsel %vm151, %v102, 0
    %155 = vmatprep.subr.bf16.mxu0 %v136
    %156 = vmatpush1.bf16.msra.mxu0 %v135
    %157 = vmatprep.subr.bf16.mxu0 %v140
    %158 = vmatpush1.bf16.msra.mxu0 %v139
    %159 = vmatprep.subr.bf16.mxu0 0
    %160 = vmatpush1.bf16.msra.mxu0 0
    %161 = vmatprep.subr.bf16.mxu0 0
    %162 = vmatpush1.bf16.msra.mxu0 0
    %163 = vmatprep.subr.bf16.mxu0 0
    %164 = vmatpush1.bf16.msra.mxu0 0
    %165 = vmatprep.subr.bf16.mxu0 0
    %166 = vmatpush1.bf16.msra.mxu0 0
    %167 = vmatprep.subr.bf16.mxu0 0
    %168 = vmatpush1.bf16.msra.mxu0 0
    %169 = vmatprep.subr.bf16.mxu0 0
    %170 = vmatpush1.bf16.msra.mxu0 0
    %171 = vmatprep.subr.bf16.mxu0 0
    %172 = vmatpush1.bf16.msra.mxu0 0
    %173 = vmatprep.subr.bf16.mxu0 0
    %174 = vmatpush1.bf16.msra.mxu0 0
    %175 = vmatprep.subr.bf16.mxu0 0
    %176 = vmatpush1.bf16.msra.mxu0 0
    %177 = vmatprep.subr.bf16.mxu0 0
    %178 = vmatpush1.bf16.msra.mxu0 0
    %179 = vmatprep.subr.bf16.mxu0 0
    %180 = vmatpush1.bf16.msra.mxu0 0
    %181 = vmatprep.subr.bf16.mxu0 0
    %182 = vmatpush1.bf16.msra.mxu0 0
    %183 = vmatprep.subr.bf16.mxu0 0
    %184 = vmatpush1.bf16.msra.mxu0 0
    %185 = vmatprep.subr.bf16.mxu0 0
    %186 = vmatpush1.bf16.msra.mxu0 0
    %187 = vmatprep.mubr.bf16.mxu0 0
    %188 = vmatmul.mubr.bf16.gmra.mrb[0].mxu0 %v153
    %v189 = vpop.f32.mrb[0].mxu0
    %v190 = vadd.f32 0.0, %v189
    %v191 = vpop.f32.mrb[0].mxu0
    %v192 = vadd.f32 0.0, %v191
    %v193 = vpop.f32.mrb[0].mxu0
    %v194 = vpop.f32.mrb[0].mxu0
    %195 = vdwg.mxu0
    %196 = vmatprep.subr.bf16.mxu0 %v138
    %197 = vmatpush1.bf16.msra.mxu0 %v137
    %198 = vmatprep.subr.bf16.mxu0 %v142
    %199 = vmatpush1.bf16.msra.mxu0 %v141
    %200 = vmatprep.subr.bf16.mxu0 0
    %201 = vmatpush1.bf16.msra.mxu0 0
    %202 = vmatprep.subr.bf16.mxu0 0
    %203 = vmatpush1.bf16.msra.mxu0 0
    %204 = vmatprep.subr.bf16.mxu0 0
    %205 = vmatpush1.bf16.msra.mxu0 0
    %206 = vmatprep.subr.bf16.mxu0 0
    %207 = vmatpush1.bf16.msra.mxu0 0
    %208 = vmatprep.subr.bf16.mxu0 0
    %209 = vmatpush1.bf16.msra.mxu0 0
    %210 = vmatprep.subr.bf16.mxu0 0
    %211 = vmatpush1.bf16.msra.mxu0 0
    %212 = vmatprep.subr.bf16.mxu0 0
    %213 = vmatpush1.bf16.msra.mxu0 0
    %214 = vmatprep.subr.bf16.mxu0 0
    %215 = vmatpush1.bf16.msra.mxu0 0
    %216 = vmatprep.subr.bf16.mxu0 0
    %217 = vmatpush1.bf16.msra.mxu0 0
    %218 = vmatprep.subr.bf16.mxu0 0
    %219 = vmatpush1.bf16.msra.mxu0 0
    %220 = vmatprep.subr.bf16.mxu0 0
    %221 = vmatpush1.bf16.msra.mxu0 0
    %222 = vmatprep.subr.bf16.mxu0 0
    %223 = vmatpush1.bf16.msra.mxu0 0
    %224 = vmatprep.subr.bf16.mxu0 0
    %225 = vmatpush1.bf16.msra.mxu0 0
    %226 = vmatprep.subr.bf16.mxu0 0
    %227 = vmatpush1.bf16.msra.mxu0 0
    %228 = vmatprep.mubr.bf16.mxu0 0
    %229 = vmatmul.mubr.bf16.gmra.mrb[0].mxu0 %v153
    %v230 = vpop.f32.mrb[0].mxu0
    %v231 = vadd.f32 0.0, %v230
    %v232 = vpop.f32.mrb[0].mxu0
    %v233 = vadd.f32 0.0, %v232
    %v234 = vpop.f32.mrb[0].mxu0
    %v235 = vpop.f32.mrb[0].mxu0
    %236 = vdwg.mxu0
    %v237 = vrot.slane %v190, 4
    %v238 = vadd.f32 %v190, %v237
    %v239 = vrot.slane %v238, 2
    %v240 = vadd.f32 %v238, %v239
    %v241 = vrot.slane %v240, 1
    %v242 = vadd.f32 %v240, %v241
    %v243 = vrot.slane %v192, 4
    %v244 = vadd.f32 %v192, %v243
    %v245 = vrot.slane %v244, 2
    %v246 = vadd.f32 %v244, %v245
    %v247 = vrot.slane %v246, 1
    %v248 = vadd.f32 %v246, %v247
    %v249 = vrot.slane %v231, 4
    %v250 = vadd.f32 %v231, %v249
    %v251 = vrot.slane %v250, 2
    %v252 = vadd.f32 %v250, %v251
    %v253 = vrot.slane %v252, 1
    %v254 = vadd.f32 %v252, %v253
    %v255 = vrot.slane %v233, 4
    %v256 = vadd.f32 %v233, %v255
    %v257 = vrot.slane %v256, 2
    %v258 = vadd.f32 %v256, %v257
    %v259 = vrot.slane %v258, 1
    %v260 = vadd.f32 %v258, %v259
    %v261 = vmul.f32 %v242, 0.125
    %v262 = vmul.f32 %v248, 0.125
    %v263 = vmul.f32 %v254, 0.125
    %v264 = vmul.f32 %v260, 0.125
    %v265 = vmul.f32 %v190, %v190
    %v266 = vmul.f32 %v192, %v192
    %v267 = vmul.f32 %v231, %v231
    %v268 = vmul.f32 %v233, %v233
    %v269 = vrot.slane %v265, 4
    %v270 = vadd.f32 %v265, %v269
    %v271 = vrot.slane %v270, 2
    %v272 = vadd.f32 %v270, %v271
    %v273 = vrot.slane %v272, 1
    %v274 = vadd.f32 %v272, %v273
    %v275 = vrot.slane %v266, 4
    %v276 = vadd.f32 %v266, %v275
    %v277 = vrot.slane %v276, 2
    %v278 = vadd.f32 %v276, %v277
    %v279 = vrot.slane %v278, 1
    %v280 = vadd.f32 %v278, %v279
    %v281 = vrot.slane %v267, 4
    %v282 = vadd.f32 %v267, %v281
    %v283 = vrot.slane %v282, 2
    %v284 = vadd.f32 %v282, %v283
    %v285 = vrot.slane %v284, 1
    %v286 = vadd.f32 %v284, %v285
    %v287 = vrot.slane %v268, 4
    %v288 = vadd.f32 %v268, %v287
    %v289 = vrot.slane %v288, 2
    %v290 = vadd.f32 %v288, %v289
    %v291 = vrot.slane %v290, 1
    %v292 = vadd.f32 %v290, %v291
    %v293 = vmul.f32 %v274, 0.125
    %v294 = vmul.f32 %v280, 0.125
    %v295 = vmul.f32 %v286, 0.125
    %v296 = vmul.f32 %v292, 0.125
    %v297 = vmul.f32 %v261, %v261
    %v298 = vmul.f32 %v262, %v262
    %v299 = vmul.f32 %v263, %v263
    %v300 = vmul.f32 %v264, %v264
    %v301 = vsub.f32 %v293, %v297
    %v302 = vsub.f32 %v294, %v298
    %v303 = vsub.f32 %v295, %v299
    %v304 = vsub.f32 %v296, %v300
    %v305 = vsub.f32 %v190, %v261
    %v306 = vsub.f32 %v192, %v262
    %v307 = vsub.f32 %v231, %v263
    %v308 = vsub.f32 %v233, %v264
    %v309 = vadd.f32 %v301, 1e-05
    %v310 = vadd.f32 %v302, 1e-05
    %v311 = vadd.f32 %v303, 1e-05
    %v312 = vadd.f32 %v304, 1e-05
    %v313 = vrsqrt.pop %v309
    %v314 = vrsqrt.pop %v310
    %v315 = vrsqrt.pop %v311
    %v316 = vrsqrt.pop %v312
    %v317 = vmul.f32 %v305, %v313
    %v318 = vmul.f32 %v306, %v314
    %v319 = vmul.f32 %v307, %v315
    %v320 = vmul.f32 %v308, %v316
    %v321 = vld [vmem:[%s3] sm:$0xf]
    %v323 = vlaneseq
    %v324 = vshrl.u32 %v323, 7
    %v325 = vsub.s32 0, %v324
    %v326 = vrot.slane %v321, %v325
    %v327 = vlaneseq
    %v328 = vshrl.u32 %v327, 7
    %v329 = vsub.s32 1, %v328
    %v330 = vrot.slane %v321, %v329
    %v331 = vlaneseq
    %v332 = vshrl.u32 %v331, 7
    %v333 = vsub.s32 2, %v332
    %v334 = vrot.slane %v321, %v333
    %v335 = vlaneseq
    %v336 = vshrl.u32 %v335, 7
    %v337 = vsub.s32 3, %v336
    %v338 = vrot.slane %v321, %v337
    %v343 = vmul.f32 %v317, %v326
    %v344 = vmul.f32 %v318, %v330
    %v345 = vmul.f32 %v319, %v334
    %v346 = vmul.f32 %v320, %v338
    %v347 = vld [vmem:[#allocation8] sm:$0xf]
    %v349 = vlaneseq
    %v350 = vshrl.u32 %v349, 7
    %v351 = vsub.s32 0, %v350
    %v352 = vrot.slane %v347, %v351
    %v353 = vlaneseq
    %v354 = vshrl.u32 %v353, 7
    %v355 = vsub.s32 1, %v354
    %v356 = vrot.slane %v347, %v355
    %v357 = vlaneseq
    %v358 = vshrl.u32 %v357, 7
    %v359 = vsub.s32 2, %v358
    %v360 = vrot.slane %v347, %v359
    %v361 = vlaneseq
    %v362 = vshrl.u32 %v361, 7
    %v363 = vsub.s32 3, %v362
    %v364 = vrot.slane %v347, %v363
    %v369 = vadd.f32 %v343, %v352
    %v370 = vadd.f32 %v344, %v356
    %v371 = vadd.f32 %v345, %v360
    %v372 = vadd.f32 %v346, %v364
    %v373 = vmax.f32 %v369, 0.0
    %v374 = vmax.f32 %v370, 0.0
    %v375 = vmax.f32 %v371, 0.0
    %v376 = vmax.f32 %v372, 0.0
    %v377 = vpack.c.bf16 %v373, %v373
    %v378 = vpack.c.bf16 %v374, %v374
    %v379 = vpack.c.bf16 %v375, %v375
    %v380 = vpack.c.bf16 %v376, %v376
    %v381 = vld [vmem:[#allocation9] sm:$0xff]
    %v382 = vld [vmem:[#allocation9 + $0x8] sm:$0xf]
    %v383 = vld [vmem:[#allocation9 + $0xc] sm:$0xff]
    %v384 = vld [vmem:[#allocation9 + $0x14] sm:$0xf]
    %v385 = vld [vmem:[#allocation9 + $0x18] sm:$0xff]
    %v386 = vld [vmem:[#allocation9 + $0x20] sm:$0xf]
    %v387 = vld [vmem:[#allocation9 + $0x24] sm:$0xff]
    %v388 = vld [vmem:[#allocation9 + $0x2c] sm:$0xf]
    %v389 = vld [vmem:[#allocation9 + $0x30] sm:$0xff]
    %v390 = vld [vmem:[#allocation9 + $0x38] sm:$0xf]
    %v391 = vld [vmem:[#allocation9 + $0x3c] sm:$0xff]
    %v392 = vld [vmem:[#allocation9 + $0x44] sm:$0xf]
    %v393 = vld [vmem:[#allocation9 + $0x48] sm:$0xff]
    %v394 = vld [vmem:[#allocation9 + $0x50] sm:$0xf]
    %v395 = vld [vmem:[#allocation9 + $0x54] sm:$0xff]
    %v396 = vld [vmem:[#allocation9 + $0x5c] sm:$0xf]
    %v397 = vld [vmem:[#allocation9 + $0x60] sm:$0xff]
    %v398 = vld [vmem:[#allocation9 + $0x68] sm:$0xf]
    %v399 = vld [vmem:[#allocation9 + $0x6c] sm:$0xff]
    %v400 = vld [vmem:[#allocation9 + $0x74] sm:$0xf]
    %v401 = vld [vmem:[#allocation9 + $0x78] sm:$0xff]
    %v402 = vld [vmem:[#allocation9 + $0x80] sm:$0xf]
    %v403 = vld [vmem:[#allocation9 + $0x84] sm:$0xff]
    %v404 = vld [vmem:[#allocation9 + $0x8c] sm:$0xf]
    %v405 = vld [vmem:[#allocation9 + $0x90] sm:$0xff]
    %v406 = vld [vmem:[#allocation9 + $0x98] sm:$0xf]
    %v407 = vld [vmem:[#allocation9 + $0x9c] sm:$0xff]
    %v408 = vld [vmem:[#allocation9 + $0xa4] sm:$0xf]
    %v409 = vld [vmem:[#allocation9 + $0xa8] sm:$0xff]
    %v410 = vld [vmem:[#allocation9 + $0xb0] sm:$0xf]
    %v411 = vld [vmem:[#allocation9 + $0xb4] sm:$0xff]
    %v412 = vld [vmem:[#allocation9 + $0xbc] sm:$0xf]
    %v413 = vld [vmem:[#allocation9 + $0xc0] sm:$0xff]
    %v414 = vld [vmem:[#allocation9 + $0xc8] sm:$0xf]
    %v415 = vld [vmem:[#allocation9 + $0xcc] sm:$0xff]
    %v416 = vld [vmem:[#allocation9 + $0xd4] sm:$0xf]
    %v417 = vld [vmem:[#allocation9 + $0xd8] sm:$0xff]
    %v418 = vld [vmem:[#allocation9 + $0xe0] sm:$0xf]
    %v419 = vld [vmem:[#allocation9 + $0xe4] sm:$0xff]
    %v420 = vld [vmem:[#allocation9 + $0xec] sm:$0xf]
    %v421 = vld [vmem:[#allocation9 + $0xf0] sm:$0xff]
    %v422 = vld [vmem:[#allocation9 + $0xf8] sm:$0xf]
    %v423 = vld [vmem:[#allocation9 + $0xfc] sm:$0xff]
    %v424 = vld [vmem:[#allocation9 + $0x104] sm:$0xf]
    %v425 = vld [vmem:[#allocation9 + $0x108] sm:$0xff]
    %v426 = vld [vmem:[#allocation9 + $0x110] sm:$0xf]
    %v427 = vld [vmem:[#allocation9 + $0x114] sm:$0xff]
    %v428 = vld [vmem:[#allocation9 + $0x11c] sm:$0xf]
    %v429 = vld [vmem:[#allocation9 + $0x120] sm:$0xff]
    %v430 = vld [vmem:[#allocation9 + $0x128] sm:$0xf]
    %v431 = vld [vmem:[#allocation9 + $0x12c] sm:$0xff]
    %v432 = vld [vmem:[#allocation9 + $0x134] sm:$0xf]
    %v433 = vld [vmem:[#allocation9 + $0x138] sm:$0xff]
    %v434 = vld [vmem:[#allocation9 + $0x140] sm:$0xf]
    %v435 = vld [vmem:[#allocation9 + $0x144] sm:$0xff]
    %v436 = vld [vmem:[#allocation9 + $0x14c] sm:$0xf]
    %v437 = vld [vmem:[#allocation9 + $0x150] sm:$0xff]
    %v438 = vld [vmem:[#allocation9 + $0x158] sm:$0xf]
    %v439 = vld [vmem:[#allocation9 + $0x15c] sm:$0xff]
    %v440 = vld [vmem:[#allocation9 + $0x164] sm:$0xf]
    %v441 = vld [vmem:[#allocation9 + $0x168] sm:$0xff]
    %v442 = vld [vmem:[#allocation9 + $0x170] sm:$0xf]
    %v443 = vld [vmem:[#allocation9 + $0x174] sm:$0xff]
    %v444 = vld [vmem:[#allocation9 + $0x17c] sm:$0xf]
    %v445 = vld [vmem:[#allocation9 + $0x180] sm:$0xff]
    %v446 = vld [vmem:[#allocation9 + $0x188] sm:$0xf]
    %v447 = vld [vmem:[#allocation9 + $0x18c] sm:$0xff]
    %v448 = vld [vmem:[#allocation9 + $0x194] sm:$0xf]
    %v449 = vld [vmem:[#allocation9 + $0x198] sm:$0xff]
    %v450 = vld [vmem:[#allocation9 + $0x1a0] sm:$0xf]
    %v451 = vld [vmem:[#allocation9 + $0x1a4] sm:$0xff]
    %v452 = vld [vmem:[#allocation9 + $0x1ac] sm:$0xf]
    %v453 = vld [vmem:[#allocation9 + $0x1b0] sm:$0xff]
    %v454 = vld [vmem:[#allocation9 + $0x1b8] sm:$0xf]
    %v455 = vld [vmem:[#allocation9 + $0x1bc] sm:$0xff]
    %v456 = vld [vmem:[#allocation9 + $0x1c4] sm:$0xf]
    %v457 = vld [vmem:[#allocation9 + $0x1c8] sm:$0xff]
    %v458 = vld [vmem:[#allocation9 + $0x1d0] sm:$0xf]
    %v459 = vld [vmem:[#allocation9 + $0x1d4] sm:$0xff]
    %v460 = vld [vmem:[#allocation9 + $0x1dc] sm:$0xf]
    %v461 = vld [vmem:[#allocation9 + $0x1e0] sm:$0xff]
    %v462 = vld [vmem:[#allocation9 + $0x1e8] sm:$0xf]
    %v463 = vld [vmem:[#allocation9 + $0x1ec] sm:$0xff]
    %v464 = vld [vmem:[#allocation9 + $0x1f4] sm:$0xf]
    %v465 = vld [vmem:[#allocation9 + $0x1f8] sm:$0xff]
    %v466 = vld [vmem:[#allocation9 + $0x200] sm:$0xf]
    %v467 = vld [vmem:[#allocation9 + $0x204] sm:$0xff]
    %v468 = vld [vmem:[#allocation9 + $0x20c] sm:$0xf]
    %v469 = vld [vmem:[#allocation9 + $0x210] sm:$0xff]
    %v470 = vld [vmem:[#allocation9 + $0x218] sm:$0xf]
    %v471 = vld [vmem:[#allocation9 + $0x21c] sm:$0xff]
    %v472 = vld [vmem:[#allocation9 + $0x224] sm:$0xf]
    %v473 = vld [vmem:[#allocation9 + $0x228] sm:$0xff]
    %v474 = vld [vmem:[#allocation9 + $0x230] sm:$0xf]
    %v475 = vld [vmem:[#allocation9 + $0x234] sm:$0xff]
    %v476 = vld [vmem:[#allocation9 + $0x23c] sm:$0xf]
    %v477 = vld [vmem:[#allocation9 + $0x240] sm:$0xff]
    %v478 = vld [vmem:[#allocation9 + $0x248] sm:$0xf]
    %v479 = vld [vmem:[#allocation9 + $0x24c] sm:$0xff]
    %v480 = vld [vmem:[#allocation9 + $0x254] sm:$0xf]
    %v481 = vld [vmem:[#allocation9 + $0x258] sm:$0xff]
    %v482 = vld [vmem:[#allocation9 + $0x260] sm:$0xf]
    %v483 = vld [vmem:[#allocation9 + $0x264] sm:$0xff]
    %v484 = vld [vmem:[#allocation9 + $0x26c] sm:$0xf]
    %v485 = vld [vmem:[#allocation9 + $0x270] sm:$0xff]
    %v486 = vld [vmem:[#allocation9 + $0x278] sm:$0xf]
    %v487 = vld [vmem:[#allocation9 + $0x27c] sm:$0xff]
    %v488 = vld [vmem:[#allocation9 + $0x284] sm:$0xf]
    %v489 = vld [vmem:[#allocation9 + $0x288] sm:$0xff]
    %v490 = vld [vmem:[#allocation9 + $0x290] sm:$0xf]
    %v491 = vld [vmem:[#allocation9 + $0x294] sm:$0xff]
    %v492 = vld [vmem:[#allocation9 + $0x29c] sm:$0xf]
    %v493 = vld [vmem:[#allocation9 + $0x2a0] sm:$0xff]
    %v494 = vld [vmem:[#allocation9 + $0x2a8] sm:$0xf]
    %v495 = vld [vmem:[#allocation9 + $0x2ac] sm:$0xff]
    %v496 = vld [vmem:[#allocation9 + $0x2b4] sm:$0xf]
    %v497 = vld [vmem:[#allocation9 + $0x2b8] sm:$0xff]
    %v498 = vld [vmem:[#allocation9 + $0x2c0] sm:$0xf]
    %v499 = vld [vmem:[#allocation9 + $0x2c4] sm:$0xff]
    %v500 = vld [vmem:[#allocation9 + $0x2cc] sm:$0xf]
    %v501 = vld [vmem:[#allocation9 + $0x2d0] sm:$0xff]
    %v502 = vld [vmem:[#allocation9 + $0x2d8] sm:$0xf]
    %v503 = vld [vmem:[#allocation9 + $0x2dc] sm:$0xff]
    %v504 = vld [vmem:[#allocation9 + $0x2e4] sm:$0xf]
    %v505 = vld [vmem:[#allocation9 + $0x2e8] sm:$0xff]
    %v506 = vld [vmem:[#allocation9 + $0x2f0] sm:$0xf]
    %v507 = vld [vmem:[#allocation9 + $0x2f4] sm:$0xff]
    %v508 = vld [vmem:[#allocation9 + $0x2fc] sm:$0xf]
    %v509 = vld [vmem:[%s1] sm:$0xf]
    %v510 = vld [vmem:[%s6] sm:$0xff]
    %v511 = vld [vmem:[%s6 + $0x8] sm:$0xf]
    %v514 = vunpack.c.l.b16 %v510
    %v515 = vunpack.c.h.b16 %v510
    %v516 = vunpack.c.l.b16 %v511
    %v517 = vpack.c.b16 %v514, %v514
    %v518 = vpack.c.b16 %v515, %v515
    %v519 = vpack.c.b16 %v516, %v516
    %vm520 = vcmask 64512
    %v522 = vsel %vm520, %v509, 0
    %vm524 = vcmask 1043456
    %v526 = vsel %vm524, %v517, 0
    %v529 = vsel %vm524, %v518, 0
    %v532 = vsel %vm524, %v519, 0
    %534 = vmatprep.subr.bf16.mxu0 %v529
    %535 = vmatpush1.bf16.msra.mxu0 %v526
    %536 = vmatprep.subr.bf16.mxu0 0
    %537 = vmatpush1.bf16.msra.mxu0 0
    %538 = vmatprep.subr.bf16.mxu0 0
    %539 = vmatpush1.bf16.msra.mxu0 0
    %540 = vmatprep.subr.bf16.mxu0 0
    %541 = vmatpush1.bf16.msra.mxu0 0
    %542 = vmatprep.subr.bf16.mxu0 0
    %543 = vmatpush1.bf16.msra.mxu0 0
    %544 = vmatprep.subr.bf16.mxu0 0
    %545 = vmatpush1.bf16.msra.mxu0 0
    %546 = vmatprep.subr.bf16.mxu0 0
    %547 = vmatpush1.bf16.msra.mxu0 0
    %548 = vmatprep.subr.bf16.mxu0 0
    %549 = vmatpush1.bf16.msra.mxu0 0
    %550 = vmatprep.subr.bf16.mxu0 0
    %551 = vmatpush1.bf16.msra.mxu0 0
    %552 = vmatprep.subr.bf16.mxu0 0
    %553 = vmatpush1.bf16.msra.mxu0 0
    %554 = vmatprep.subr.bf16.mxu0 0
    %555 = vmatpush1.bf16.msra.mxu0 0
    %556 = vmatprep.subr.bf16.mxu0 0
    %557 = vmatpush1.bf16.msra.mxu0 0
    %558 = vmatprep.subr.bf16.mxu0 0
    %559 = vmatpush1.bf16.msra.mxu0 0
    %560 = vmatprep.subr.bf16.mxu0 0
    %561 = vmatpush1.bf16.msra.mxu0 0
    %562 = vmatprep.subr.bf16.mxu0 0
    %563 = vmatpush1.bf16.msra.mxu0 0
    %564 = vmatprep.subr.bf16.mxu0 0
    %565 = vmatpush1.bf16.msra.mxu0 0
    %566 = vmatprep.mubr.bf16.mxu0 0
    %567 = vmatmul.mubr.bf16.gmra.mrb[0].mxu0 %v522
    %v568 = vpop.f32.mrb[0].mxu0
    %v569 = vadd.f32 0.0, %v568
    %v570 = vpop.f32.mrb[0].mxu0
    %v571 = vadd.f32 0.0, %v570
    %v572 = vpop.f32.mrb[0].mxu0
    %v573 = vpop.f32.mrb[0].mxu0
    %574 = vdwg.mxu0
    %575 = vmatprep.subr.bf16.mxu0 0
    %576 = vmatpush1.bf16.msra.mxu0 %v532
    %577 = vmatprep.subr.bf16.mxu0 0
    %578 = vmatpush1.bf16.msra.mxu0 0
    %579 = vmatprep.subr.bf16.mxu0 0
    %580 = vmatpush1.bf16.msra.mxu0 0
    %581 = vmatprep.subr.bf16.mxu0 0
    %582 = vmatpush1.bf16.msra.mxu0 0
    %583 = vmatprep.subr.bf16.mxu0 0
    %584 = vmatpush1.bf16.msra.mxu0 0
    %585 = vmatprep.subr.bf16.mxu0 0
    %586 = vmatpush1.bf16.msra.mxu0 0
    %587 = vmatprep.subr.bf16.mxu0 0
    %588 = vmatpush1.bf16.msra.mxu0 0
    %589 = vmatprep.subr.bf16.mxu0 0
    %590 = vmatpush1.bf16.msra.mxu0 0
    %591 = vmatprep.subr.bf16.mxu0 0
    %592 = vmatpush1.bf16.msra.mxu0 0
    %593 = vmatprep.subr.bf16.mxu0 0
    %594 = vmatpush1.bf16.msra.mxu0 0
    %595 = vmatprep.subr.bf16.mxu0 0
    %596 = vmatpush1.bf16.msra.mxu0 0
    %597 = vmatprep.subr.bf16.mxu0 0
    %598 = vmatpush1.bf16.msra.mxu0 0
    %599 = vmatprep.subr.bf16.mxu0 0
    %600 = vmatpush1.bf16.msra.mxu0 0
    %601 = vmatprep.subr.bf16.mxu0 0
    %602 = vmatpush1.bf16.msra.mxu0 0
    %603 = vmatprep.subr.bf16.mxu0 0
    %604 = vmatpush1.bf16.msra.mxu0 0
    %605 = vmatprep.subr.bf16.mxu0 0
    %606 = vmatpush1.bf16.msra.mxu0 0
    %607 = vmatprep.mubr.bf16.mxu0 0
    %608 = vmatmul.mubr.bf16.gmra.mrb[0].mxu0 %v522
    %v609 = vpop.f32.mrb[0].mxu0
    %v610 = vadd.f32 0.0, %v609
    %v611 = vpop.f32.mrb[0].mxu0
    %v612 = vpop.f32.mrb[0].mxu0
    %v613 = vpop.f32.mrb[0].mxu0
    %614 = vdwg.mxu0
    %v743 = vunpack.c.l.b16 %v381
    %v744 = vunpack.c.h.b16 %v381
    %v745 = vunpack.c.l.b16 %v382
    %v746 = vunpack.c.l.b16 %v383
    %v747 = vunpack.c.h.b16 %v383
    %v748 = vunpack.c.l.b16 %v384
    %v749 = vunpack.c.l.b16 %v385
    %v750 = vunpack.c.h.b16 %v385
    %v751 = vunpack.c.l.b16 %v386
    %v752 = vunpack.c.l.b16 %v387
    %v753 = vunpack.c.h.b16 %v387
    %v754 = vunpack.c.l.b16 %v388
    %v755 = vunpack.c.l.b16 %v389
    %v756 = vunpack.c.h.b16 %v389
    %v757 = vunpack.c.l.b16 %v390
    %v758 = vunpack.c.l.b16 %v391
    %v759 = vunpack.c.h.b16 %v391
    %v760 = vunpack.c.l.b16 %v392
    %v761 = vunpack.c.l.b16 %v393
    %v762 = vunpack.c.h.b16 %v393
    %v763 = vunpack.c.l.b16 %v394
    %v764 = vunpack.c.l.b16 %v395
    %v765 = vunpack.c.h.b16 %v395
    %v766 = vunpack.c.l.b16 %v396
    %v767 = vunpack.c.l.b16 %v397
    %v768 = vunpack.c.h.b16 %v397
    %v769 = vunpack.c.l.b16 %v398
    %v770 = vunpack.c.l.b16 %v399
    %v771 = vunpack.c.h.b16 %v399
    %v772 = vunpack.c.l.b16 %v400
    %v773 = vunpack.c.l.b16 %v401
    %v774 = vunpack.c.h.b16 %v401
    %v775 = vunpack.c.l.b16 %v402
    %v776 = vunpack.c.l.b16 %v403
    %v777 = vunpack.c.h.b16 %v403
    %v778 = vunpack.c.l.b16 %v404
    %v779 = vunpack.c.l.b16 %v405
    %v780 = vunpack.c.h.b16 %v405
    %v781 = vunpack.c.l.b16 %v406
    %v782 = vunpack.c.l.b16 %v407
    %v783 = vunpack.c.h.b16 %v407
    %v784 = vunpack.c.l.b16 %v408
    %v785 = vunpack.c.l.b16 %v409
    %v786 = vunpack.c.h.b16 %v409
    %v787 = vunpack.c.l.b16 %v410
    %v788 = vunpack.c.l.b16 %v411
    %v789 = vunpack.c.h.b16 %v411
    %v790 = vunpack.c.l.b16 %v412
    %v791 = vunpack.c.l.b16 %v413
    %v792 = vunpack.c.h.b16 %v413
    %v793 = vunpack.c.l.b16 %v414
    %v794 = vunpack.c.l.b16 %v415
    %v795 = vunpack.c.h.b16 %v415
    %v796 = vunpack.c.l.b16 %v416
    %v797 = vunpack.c.l.b16 %v417
    %v798 = vunpack.c.h.b16 %v417
    %v799 = vunpack.c.l.b16 %v418
    %v800 = vunpack.c.l.b16 %v419
    %v801 = vunpack.c.h.b16 %v419
    %v802 = vunpack.c.l.b16 %v420
    %v803 = vunpack.c.l.b16 %v421
    %v804 = vunpack.c.h.b16 %v421
    %v805 = vunpack.c.l.b16 %v422
    %v806 = vunpack.c.l.b16 %v423
    %v807 = vunpack.c.h.b16 %v423
    %v808 = vunpack.c.l.b16 %v424
    %v809 = vunpack.c.l.b16 %v425
    %v810 = vunpack.c.h.b16 %v425
    %v811 = vunpack.c.l.b16 %v426
    %v812 = vunpack.c.l.b16 %v427
    %v813 = vunpack.c.h.b16 %v427
    %v814 = vunpack.c.l.b16 %v428
    %v815 = vunpack.c.l.b16 %v429
    %v816 = vunpack.c.h.b16 %v429
    %v817 = vunpack.c.l.b16 %v430
    %v818 = vunpack.c.l.b16 %v431
    %v819 = vunpack.c.h.b16 %v431
    %v820 = vunpack.c.l.b16 %v432
    %v821 = vunpack.c.l.b16 %v433
    %v822 = vunpack.c.h.b16 %v433
    %v823 = vunpack.c.l.b16 %v434
    %v824 = vunpack.c.l.b16 %v435
    %v825 = vunpack.c.h.b16 %v435
    %v826 = vunpack.c.l.b16 %v436
    %v827 = vunpack.c.l.b16 %v437
    %v828 = vunpack.c.h.b16 %v437
    %v829 = vunpack.c.l.b16 %v438
    %v830 = vunpack.c.l.b16 %v439
    %v831 = vunpack.c.h.b16 %v439
    %v832 = vunpack.c.l.b16 %v440
    %v833 = vunpack.c.l.b16 %v441
    %v834 = vunpack.c.h.b16 %v441
    %v835 = vunpack.c.l.b16 %v442
    %v836 = vunpack.c.l.b16 %v443
    %v837 = vunpack.c.h.b16 %v443
    %v838 = vunpack.c.l.b16 %v444
    %v839 = vunpack.c.l.b16 %v445
    %v840 = vunpack.c.h.b16 %v445
    %v841 = vunpack.c.l.b16 %v446
    %v842 = vunpack.c.l.b16 %v447
    %v843 = vunpack.c.h.b16 %v447
    %v844 = vunpack.c.l.b16 %v448
    %v845 = vunpack.c.l.b16 %v449
    %v846 = vunpack.c.h.b16 %v449
    %v847 = vunpack.c.l.b16 %v450
    %v848 = vunpack.c.l.b16 %v451
    %v849 = vunpack.c.h.b16 %v451
    %v850 = vunpack.c.l.b16 %v452
    %v851 = vunpack.c.l.b16 %v453
    %v852 = vunpack.c.h.b16 %v453
    %v853 = vunpack.c.l.b16 %v454
    %v854 = vunpack.c.l.b16 %v455
    %v855 = vunpack.c.h.b16 %v455
    %v856 = vunpack.c.l.b16 %v456
    %v857 = vunpack.c.l.b16 %v457
    %v858 = vunpack.c.h.b16 %v457
    %v859 = vunpack.c.l.b16 %v458
    %v860 = vunpack.c.l.b16 %v459
    %v861 = vunpack.c.h.b16 %v459
    %v862 = vunpack.c.l.b16 %v460
    %v863 = vunpack.c.l.b16 %v461
    %v864 = vunpack.c.h.b16 %v461
    %v865 = vunpack.c.l.b16 %v462
    %v866 = vunpack.c.l.b16 %v463
    %v867 = vunpack.c.h.b16 %v463
    %v868 = vunpack.c.l.b16 %v464
    %v869 = vunpack.c.l.b16 %v465
    %v870 = vunpack.c.h.b16 %v465
    %v871 = vunpack.c.l.b16 %v466
    %v872 = vunpack.c.l.b16 %v467
    %v873 = vunpack.c.h.b16 %v467
    %v874 = vunpack.c.l.b16 %v468
    %v875 = vunpack.c.l.b16 %v469
    %v876 = vunpack.c.h.b16 %v469
    %v877 = vunpack.c.l.b16 %v470
    %v878 = vunpack.c.l.b16 %v471
    %v879 = vunpack.c.h.b16 %v471
    %v880 = vunpack.c.l.b16 %v472
    %v881 = vunpack.c.l.b16 %v473
    %v882 = vunpack.c.h.b16 %v473
    %v883 = vunpack.c.l.b16 %v474
    %v884 = vunpack.c.l.b16 %v475
    %v885 = vunpack.c.h.b16 %v475
    %v886 = vunpack.c.l.b16 %v476
    %v887 = vunpack.c.l.b16 %v477
    %v888 = vunpack.c.h.b16 %v477
    %v889 = vunpack.c.l.b16 %v478
    %v890 = vunpack.c.l.b16 %v479
    %v891 = vunpack.c.h.b16 %v479
    %v892 = vunpack.c.l.b16 %v480
    %v893 = vunpack.c.l.b16 %v481
    %v894 = vunpack.c.h.b16 %v481
    %v895 = vunpack.c.l.b16 %v482
    %v896 = vunpack.c.l.b16 %v483
    %v897 = vunpack.c.h.b16 %v483
    %v898 = vunpack.c.l.b16 %v484
    %v899 = vunpack.c.l.b16 %v485
    %v900 = vunpack.c.h.b16 %v485
    %v901 = vunpack.c.l.b16 %v486
    %v902 = vunpack.c.l.b16 %v487
    %v903 = vunpack.c.h.b16 %v487
    %v904 = vunpack.c.l.b16 %v488
    %v905 = vunpack.c.l.b16 %v489
    %v906 = vunpack.c.h.b16 %v489
    %v907 = vunpack.c.l.b16 %v490
    %v908 = vunpack.c.l.b16 %v491
    %v909 = vunpack.c.h.b16 %v491
    %v910 = vunpack.c.l.b16 %v492
    %v911 = vunpack.c.l.b16 %v493
    %v912 = vunpack.c.h.b16 %v493
    %v913 = vunpack.c.l.b16 %v494
    %v914 = vunpack.c.l.b16 %v495
    %v915 = vunpack.c.h.b16 %v495
    %v916 = vunpack.c.l.b16 %v496
    %v917 = vunpack.c.l.b16 %v497
    %v918 = vunpack.c.h.b16 %v497
    %v919 = vunpack.c.l.b16 %v498
    %v920 = vunpack.c.l.b16 %v499
    %v921 = vunpack.c.h.b16 %v499
    %v922 = vunpack.c.l.b16 %v500
    %v923 = vunpack.c.l.b16 %v501
    %v924 = vunpack.c.h.b16 %v501
    %v925 = vunpack.c.l.b16 %v502
    %v926 = vunpack.c.l.b16 %v503
    %v927 = vunpack.c.h.b16 %v503
    %v928 = vunpack.c.l.b16 %v504
    %v929 = vunpack.c.l.b16 %v505
    %v930 = vunpack.c.h.b16 %v505
    %v931 = vunpack.c.l.b16 %v506
    %v932 = vunpack.c.l.b16 %v507
    %v933 = vunpack.c.h.b16 %v507
    %v934 = vunpack.c.l.b16 %v508
    %v935 = vpack.c.b16 %v746, %v743
    %v936 = vpack.c.b16 %v747, %v744
    %v937 = vpack.c.b16 %v748, %v745
    %v938 = vpack.c.b16 %v752, %v749
    %v939 = vpack.c.b16 %v753, %v750
    %v940 = vpack.c.b16 %v754, %v751
    %v941 = vpack.c.b16 %v758, %v755
    %v942 = vpack.c.b16 %v759, %v756
    %v943 = vpack.c.b16 %v760, %v757
    %v944 = vpack.c.b16 %v764, %v761
    %v945 = vpack.c.b16 %v765, %v762
    %v946 = vpack.c.b16 %v766, %v763
    %v947 = vpack.c.b16 %v770, %v767
    %v948 = vpack.c.b16 %v771, %v768
    %v949 = vpack.c.b16 %v772, %v769
    %v950 = vpack.c.b16 %v776, %v773
    %v951 = vpack.c.b16 %v777, %v774
    %v952 = vpack.c.b16 %v778, %v775
    %v953 = vpack.c.b16 %v782, %v779
    %v954 = vpack.c.b16 %v783, %v780
    %v955 = vpack.c.b16 %v784, %v781
    %v956 = vpack.c.b16 %v788, %v785
    %v957 = vpack.c.b16 %v789, %v786
    %v958 = vpack.c.b16 %v790, %v787
    %v959 = vpack.c.b16 %v794, %v791
    %v960 = vpack.c.b16 %v795, %v792
    %v961 = vpack.c.b16 %v796, %v793
    %v962 = vpack.c.b16 %v800, %v797
    %v963 = vpack.c.b16 %v801, %v798
    %v964 = vpack.c.b16 %v802, %v799
    %v965 = vpack.c.b16 %v806, %v803
    %v966 = vpack.c.b16 %v807, %v804
    %v967 = vpack.c.b16 %v808, %v805
    %v968 = vpack.c.b16 %v812, %v809
    %v969 = vpack.c.b16 %v813, %v810
    %v970 = vpack.c.b16 %v814, %v811
    %v971 = vpack.c.b16 %v818, %v815
    %v972 = vpack.c.b16 %v819, %v816
    %v973 = vpack.c.b16 %v820, %v817
    %v974 = vpack.c.b16 %v824, %v821
    %v975 = vpack.c.b16 %v825, %v822
    %v976 = vpack.c.b16 %v826, %v823
    %v977 = vpack.c.b16 %v830, %v827
    %v978 = vpack.c.b16 %v831, %v828
    %v979 = vpack.c.b16 %v832, %v829
    %v980 = vpack.c.b16 %v836, %v833
    %v981 = vpack.c.b16 %v837, %v834
    %v982 = vpack.c.b16 %v838, %v835
    %v983 = vpack.c.b16 %v842, %v839
    %v984 = vpack.c.b16 %v843, %v840
    %v985 = vpack.c.b16 %v844, %v841
    %v986 = vpack.c.b16 %v848, %v845
    %v987 = vpack.c.b16 %v849, %v846
    %v988 = vpack.c.b16 %v850, %v847
    %v989 = vpack.c.b16 %v854, %v851
    %v990 = vpack.c.b16 %v855, %v852
    %v991 = vpack.c.b16 %v856, %v853
    %v992 = vpack.c.b16 %v860, %v857
    %v993 = vpack.c.b16 %v861, %v858
    %v994 = vpack.c.b16 %v862, %v859
    %v995 = vpack.c.b16 %v866, %v863
    %v996 = vpack.c.b16 %v867, %v864
    %v997 = vpack.c.b16 %v868, %v865
    %v998 = vpack.c.b16 %v872, %v869
    %v999 = vpack.c.b16 %v873, %v870
    %v1000 = vpack.c.b16 %v874, %v871
    %v1001 = vpack.c.b16 %v878, %v875
    %v1002 = vpack.c.b16 %v879, %v876
    %v1003 = vpack.c.b16 %v880, %v877
    %v1004 = vpack.c.b16 %v884, %v881
    %v1005 = vpack.c.b16 %v885, %v882
    %v1006 = vpack.c.b16 %v886, %v883
    %v1007 = vpack.c.b16 %v890, %v887
    %v1008 = vpack.c.b16 %v891, %v888
    %v1009 = vpack.c.b16 %v892, %v889
    %v1010 = vpack.c.b16 %v896, %v893
    %v1011 = vpack.c.b16 %v897, %v894
    %v1012 = vpack.c.b16 %v898, %v895
    %v1013 = vpack.c.b16 %v902, %v899
    %v1014 = vpack.c.b16 %v903, %v900
    %v1015 = vpack.c.b16 %v904, %v901
    %v1016 = vpack.c.b16 %v908, %v905
    %v1017 = vpack.c.b16 %v909, %v906
    %v1018 = vpack.c.b16 %v910, %v907
    %v1019 = vpack.c.b16 %v914, %v911
    %v1020 = vpack.c.b16 %v915, %v912
    %v1021 = vpack.c.b16 %v916, %v913
    %v1022 = vpack.c.b16 %v920, %v917
    %v1023 = vpack.c.b16 %v921, %v918
    %v1024 = vpack.c.b16 %v922, %v919
    %v1025 = vpack.c.b16 %v926, %v923
    %v1026 = vpack.c.b16 %v927, %v924
    %v1027 = vpack.c.b16 %v928, %v925
    %v1028 = vpack.c.b16 %v932, %v929
    %v1029 = vpack.c.b16 %v933, %v930
    %v1030 = vpack.c.b16 %v934, %v931
    %1127 = vmatprep.subr.bf16.mxu0 %v936
    %1128 = vmatpush1.bf16.msra.mxu0 %v935
    %1129 = vmatprep.subr.bf16.mxu0 %v939
    %1130 = vmatpush1.bf16.msra.mxu0 %v938
    %1131 = vmatprep.subr.bf16.mxu0 %v942
    %1132 = vmatpush1.bf16.msra.mxu0 %v941
    %1133 = vmatprep.subr.bf16.mxu0 %v945
    %1134 = vmatpush1.bf16.msra.mxu0 %v944
    %1135 = vmatprep.subr.bf16.mxu0 %v948
    %1136 = vmatpush1.bf16.msra.mxu0 %v947
    %1137 = vmatprep.subr.bf16.mxu0 %v951
    %1138 = vmatpush1.bf16.msra.mxu0 %v950
    %1139 = vmatprep.subr.bf16.mxu0 %v954
    %1140 = vmatpush1.bf16.msra.mxu0 %v953
    %1141 = vmatprep.subr.bf16.mxu0 %v957
    %1142 = vmatpush1.bf16.msra.mxu0 %v956
    %1143 = vmatprep.subr.bf16.mxu0 %v960
    %1144 = vmatpush1.bf16.msra.mxu0 %v959
    %1145 = vmatprep.subr.bf16.mxu0 %v963
    %1146 = vmatpush1.bf16.msra.mxu0 %v962
    %1147 = vmatprep.subr.bf16.mxu0 %v966
    %1148 = vmatpush1.bf16.msra.mxu0 %v965
    %1149 = vmatprep.subr.bf16.mxu0 %v969
    %1150 = vmatpush1.bf16.msra.mxu0 %v968
    %1151 = vmatprep.subr.bf16.mxu0 %v972
    %1152 = vmatpush1.bf16.msra.mxu0 %v971
    %1153 = vmatprep.subr.bf16.mxu0 %v975
    %1154 = vmatpush1.bf16.msra.mxu0 %v974
    %1155 = vmatprep.subr.bf16.mxu0 %v978
    %1156 = vmatpush1.bf16.msra.mxu0 %v977
    %1157 = vmatprep.subr.bf16.mxu0 %v981
    %1158 = vmatpush1.bf16.msra.mxu0 %v980
    %1159 = vmatprep.mubr.bf16.mxu0 %v378
    %1160 = vmatmul.mubr.bf16.gmra.mrb[0].mxu0 %v377
    %v1161 = vpop.f32.mrb[0].mxu0
    %v1162 = vadd.f32 %v569, %v1161
    %v1163 = vpop.f32.mrb[0].mxu0
    %v1164 = vadd.f32 %v571, %v1163
    %v1165 = vpop.f32.mrb[0].mxu0
    %v1166 = vpop.f32.mrb[0].mxu0
    %1167 = vdwg.mxu0
    %1168 = vmatprep.subr.bf16.mxu0 %v984
    %1169 = vmatpush1.bf16.msra.mxu0 %v983
    %1170 = vmatprep.subr.bf16.mxu0 %v987
    %1171 = vmatpush1.bf16.msra.mxu0 %v986
    %1172 = vmatprep.subr.bf16.mxu0 %v990
    %1173 = vmatpush1.bf16.msra.mxu0 %v989
    %1174 = vmatprep.subr.bf16.mxu0 %v993
    %1175 = vmatpush1.bf16.msra.mxu0 %v992
    %1176 = vmatprep.subr.bf16.mxu0 %v996
    %1177 = vmatpush1.bf16.msra.mxu0 %v995
    %1178 = vmatprep.subr.bf16.mxu0 %v999
    %1179 = vmatpush1.bf16.msra.mxu0 %v998
    %1180 = vmatprep.subr.bf16.mxu0 %v1002
    %1181 = vmatpush1.bf16.msra.mxu0 %v1001
    %1182 = vmatprep.subr.bf16.mxu0 %v1005
    %1183 = vmatpush1.bf16.msra.mxu0 %v1004
    %1184 = vmatprep.subr.bf16.mxu0 %v1008
    %1185 = vmatpush1.bf16.msra.mxu0 %v1007
    %1186 = vmatprep.subr.bf16.mxu0 %v1011
    %1187 = vmatpush1.bf16.msra.mxu0 %v1010
    %1188 = vmatprep.subr.bf16.mxu0 %v1014
    %1189 = vmatpush1.bf16.msra.mxu0 %v1013
    %1190 = vmatprep.subr.bf16.mxu0 %v1017
    %1191 = vmatpush1.bf16.msra.mxu0 %v1016
    %1192 = vmatprep.subr.bf16.mxu0 %v1020
    %1193 = vmatpush1.bf16.msra.mxu0 %v1019
    %1194 = vmatprep.subr.bf16.mxu0 %v1023
    %1195 = vmatpush1.bf16.msra.mxu0 %v1022
    %1196 = vmatprep.subr.bf16.mxu0 %v1026
    %1197 = vmatpush1.bf16.msra.mxu0 %v1025
    %1198 = vmatprep.subr.bf16.mxu0 %v1029
    %1199 = vmatpush1.bf16.msra.mxu0 %v1028
    %1200 = vmatprep.mubr.bf16.mxu0 %v380
    %1201 = vmatmul.mubr.bf16.gmra.mrb[0].mxu0 %v379
    %v1202 = vpop.f32.mrb[0].mxu0
    %v1203 = vadd.f32 %v1162, %v1202
    %v1204 = vpop.f32.mrb[0].mxu0
    %v1205 = vadd.f32 %v1164, %v1204
    %v1206 = vpop.f32.mrb[0].mxu0
    %v1207 = vpop.f32.mrb[0].mxu0
    %1208 = vdwg.mxu0
    %1209 = vmatprep.subr.bf16.mxu0 0
    %1210 = vmatpush1.bf16.msra.mxu0 %v937
    %1211 = vmatprep.subr.bf16.mxu0 0
    %1212 = vmatpush1.bf16.msra.mxu0 %v940
    %1213 = vmatprep.subr.bf16.mxu0 0
    %1214 = vmatpush1.bf16.msra.mxu0 %v943
    %1215 = vmatprep.subr.bf16.mxu0 0
    %1216 = vmatpush1.bf16.msra.mxu0 %v946
    %1217 = vmatprep.subr.bf16.mxu0 0
    %1218 = vmatpush1.bf16.msra.mxu0 %v949
    %1219 = vmatprep.subr.bf16.mxu0 0
    %1220 = vmatpush1.bf16.msra.mxu0 %v952
    %1221 = vmatprep.subr.bf16.mxu0 0
    %1222 = vmatpush1.bf16.msra.mxu0 %v955
    %1223 = vmatprep.subr.bf16.mxu0 0
    %1224 = vmatpush1.bf16.msra.mxu0 %v958
    %1225 = vmatprep.subr.bf16.mxu0 0
    %1226 = vmatpush1.bf16.msra.mxu0 %v961
    %1227 = vmatprep.subr.bf16.mxu0 0
    %1228 = vmatpush1.bf16.msra.mxu0 %v964
    %1229 = vmatprep.subr.bf16.mxu0 0
    %1230 = vmatpush1.bf16.msra.mxu0 %v967
    %1231 = vmatprep.subr.bf16.mxu0 0
    %1232 = vmatpush1.bf16.msra.mxu0 %v970
    %1233 = vmatprep.subr.bf16.mxu0 0
    %1234 = vmatpush1.bf16.msra.mxu0 %v973
    %1235 = vmatprep.subr.bf16.mxu0 0
    %1236 = vmatpush1.bf16.msra.mxu0 %v976
    %1237 = vmatprep.subr.bf16.mxu0 0
    %1238 = vmatpush1.bf16.msra.mxu0 %v979
    %1239 = vmatprep.subr.bf16.mxu0 0
    %1240 = vmatpush1.bf16.msra.mxu0 %v982
    %1241 = vmatprep.mubr.bf16.mxu0 %v378
    %1242 = vmatmul.mubr.bf16.gmra.mrb[0].mxu0 %v377
    %v1243 = vpop.f32.mrb[0].mxu0
    %v1244 = vadd.f32 %v610, %v1243
    %v1245 = vpop.f32.mrb[0].mxu0
    %v1246 = vpop.f32.mrb[0].mxu0
    %v1247 = vpop.f32.mrb[0].mxu0
    %1248 = vdwg.mxu0
    %1249 = vmatprep.subr.bf16.mxu0 0
    %1250 = vmatpush1.bf16.msra.mxu0 %v985
    %1251 = vmatprep.subr.bf16.mxu0 0
    %1252 = vmatpush1.bf16.msra.mxu0 %v988
    %1253 = vmatprep.subr.bf16.mxu0 0
    %1254 = vmatpush1.bf16.msra.mxu0 %v991
    %1255 = vmatprep.subr.bf16.mxu0 0
    %1256 = vmatpush1.bf16.msra.mxu0 %v994
    %1257 = vmatprep.subr.bf16.mxu0 0
    %1258 = vmatpush1.bf16.msra.mxu0 %v997
    %1259 = vmatprep.subr.bf16.mxu0 0
    %1260 = vmatpush1.bf16.msra.mxu0 %v1000
    %1261 = vmatprep.subr.bf16.mxu0 0
    %1262 = vmatpush1.bf16.msra.mxu0 %v1003
    %1263 = vmatprep.subr.bf16.mxu0 0
    %1264 = vmatpush1.bf16.msra.mxu0 %v1006
    %1265 = vmatprep.subr.bf16.mxu0 0
    %1266 = vmatpush1.bf16.msra.mxu0 %v1009
    %1267 = vmatprep.subr.bf16.mxu0 0
    %1268 = vmatpush1.bf16.msra.mxu0 %v1012
    %1269 = vmatprep.subr.bf16.mxu0 0
    %1270 = vmatpush1.bf16.msra.mxu0 %v1015
    %1271 = vmatprep.subr.bf16.mxu0 0
    %1272 = vmatpush1.bf16.msra.mxu0 %v1018
    %1273 = vmatprep.subr.bf16.mxu0 0
    %1274 = vmatpush1.bf16.msra.mxu0 %v1021
    %1275 = vmatprep.subr.bf16.mxu0 0
    %1276 = vmatpush1.bf16.msra.mxu0 %v1024
    %1277 = vmatprep.subr.bf16.mxu0 0
    %1278 = vmatpush1.bf16.msra.mxu0 %v1027
    %1279 = vmatprep.subr.bf16.mxu0 0
    %1280 = vmatpush1.bf16.msra.mxu0 %v1030
    %1281 = vmatprep.mubr.bf16.mxu0 %v380
    %1282 = vmatmul.mubr.bf16.gmra.mrb[0].mxu0 %v379
    %v1283 = vpop.f32.mrb[0].mxu0
    %v1284 = vadd.f32 %v1244, %v1283
    %v1285 = vpop.f32.mrb[0].mxu0
    %v1286 = vpop.f32.mrb[0].mxu0
    %v1287 = vpop.f32.mrb[0].mxu0
    %1288 = vdwg.mxu0
    %v1289 = vld [vmem:[%s7] sm:$0x7]
    %v1291 = vlaneseq
    %v1292 = vshrl.u32 %v1291, 7
    %v1293 = vsub.s32 0, %v1292
    %v1294 = vrot.slane %v1289, %v1293
    %v1295 = vlaneseq
    %v1296 = vshrl.u32 %v1295, 7
    %v1297 = vsub.s32 1, %v1296
    %v1298 = vrot.slane %v1289, %v1297
    %v1299 = vlaneseq
    %v1300 = vshrl.u32 %v1299, 7
    %v1301 = vsub.s32 2, %v1300
    %v1302 = vrot.slane %v1289, %v1301
    %v1306 = vadd.f32 %v1203, %v1294
    %v1307 = vadd.f32 %v1205, %v1298
    %v1308 = vadd.f32 %v1284, %v1302
    %v1309 = vmax.f32 %v1306, 0.0
    %v1310 = vmax.f32 %v1307, 0.0
    %v1311 = vmax.f32 %v1308, 0.0
    %v1312 = vpack.c.bf16 %v1309, %v1309
    %v1313 = vpack.c.bf16 %v1310, %v1310
    %v1314 = vpack.c.bf16 %v1311, %v1311
    %v1315 = vld [vmem:[#allocation11] sm:$0xf]
    %v1316 = vld [vmem:[#allocation11 + $0x4] sm:$0xf]
    %v1317 = vld [vmem:[#allocation11 + $0x8] sm:$0xf]
    %v1318 = vld [vmem:[#allocation11 + $0xc] sm:$0xf]
    %v1319 = vld [vmem:[#allocation11 + $0x10] sm:$0xf]
    %v1320 = vld [vmem:[#allocation11 + $0x14] sm:$0xf]
    %v1321 = vld [vmem:[#allocation11 + $0x18] sm:$0xf]
    %v1322 = vld [vmem:[#allocation11 + $0x1c] sm:$0xf]
    %v1323 = vld [vmem:[#allocation11 + $0x20] sm:$0xf]
    %v1324 = vld [vmem:[#allocation11 + $0x24] sm:$0xf]
    %v1325 = vld [vmem:[#allocation11 + $0x28] sm:$0xf]
    %v1326 = vld [vmem:[#allocation11 + $0x2c] sm:$0xf]
    %v1327 = vld [vmem:[#allocation11 + $0x30] sm:$0xf]
    %v1328 = vld [vmem:[#allocation11 + $0x34] sm:$0xf]
    %v1329 = vld [vmem:[#allocation11 + $0x38] sm:$0xf]
    %v1330 = vld [vmem:[#allocation11 + $0x3c] sm:$0xf]
    %v1331 = vld [vmem:[#allocation11 + $0x40] sm:$0xf]
    %v1332 = vld [vmem:[#allocation11 + $0x44] sm:$0xf]
    %v1333 = vld [vmem:[#allocation11 + $0x48] sm:$0xf]
    %v1334 = vld [vmem:[#allocation11 + $0x4c] sm:$0xf]
    %v1335 = vld [vmem:[#allocation11 + $0x50] sm:$0xf]
    %v1336 = vld [vmem:[#allocation11 + $0x54] sm:$0xf]
    %v1337 = vld [vmem:[#allocation11 + $0x58] sm:$0xf]
    %v1338 = vld [vmem:[#allocation11 + $0x5c] sm:$0xf]
    %v1339 = vld [vmem:[#allocation11 + $0x60] sm:$0xf]
    %v1340 = vld [vmem:[#allocation11 + $0x64] sm:$0xf]
    %v1341 = vld [vmem:[#allocation11 + $0x68] sm:$0xf]
    %v1342 = vld [vmem:[#allocation11 + $0x6c] sm:$0xf]
    %v1343 = vld [vmem:[#allocation11 + $0x70] sm:$0xf]
    %v1344 = vld [vmem:[#allocation11 + $0x74] sm:$0xf]
    %v1345 = vld [vmem:[#allocation11 + $0x78] sm:$0xf]
    %v1346 = vld [vmem:[#allocation11 + $0x7c] sm:$0xf]
    %v1347 = vld [vmem:[#allocation11 + $0x80] sm:$0xf]
    %v1348 = vld [vmem:[#allocation11 + $0x84] sm:$0xf]
    %v1349 = vld [vmem:[#allocation11 + $0x88] sm:$0xf]
    %v1350 = vld [vmem:[#allocation11 + $0x8c] sm:$0xf]
    %v1351 = vld [vmem:[#allocation11 + $0x90] sm:$0xf]
    %v1352 = vld [vmem:[#allocation11 + $0x94] sm:$0xf]
    %v1353 = vld [vmem:[#allocation11 + $0x98] sm:$0xf]
    %v1354 = vld [vmem:[#allocation11 + $0x9c] sm:$0xf]
    %v1355 = vld [vmem:[#allocation11 + $0xa0] sm:$0xf]
    %v1356 = vld [vmem:[#allocation11 + $0xa4] sm:$0xf]
    %v1357 = vld [vmem:[#allocation11 + $0xa8] sm:$0xf]
    %v1358 = vld [vmem:[#allocation11 + $0xac] sm:$0xf]
    %v1359 = vld [vmem:[#allocation11 + $0xb0] sm:$0xf]
    %v1360 = vld [vmem:[#allocation11 + $0xb4] sm:$0xf]
    %v1361 = vld [vmem:[#allocation11 + $0xb8] sm:$0xf]
    %v1362 = vld [vmem:[#allocation11 + $0xbc] sm:$0xf]
    %s1363 = sld [smem:[#allocation2]]
    %v1364 = vstv %s1363
    %v1413 = vunpack.c.l.b16 %v1315
    %v1414 = vunpack.c.l.b16 %v1316
    %v1415 = vunpack.c.l.b16 %v1317
    %v1416 = vunpack.c.l.b16 %v1318
    %v1417 = vunpack.c.l.b16 %v1319
    %v1418 = vunpack.c.l.b16 %v1320
    %v1419 = vunpack.c.l.b16 %v1321
    %v1420 = vunpack.c.l.b16 %v1322
    %v1421 = vunpack.c.l.b16 %v1323
    %v1422 = vunpack.c.l.b16 %v1324
    %v1423 = vunpack.c.l.b16 %v1325
    %v1424 = vunpack.c.l.b16 %v1326
    %v1425 = vunpack.c.l.b16 %v1327
    %v1426 = vunpack.c.l.b16 %v1328
    %v1427 = vunpack.c.l.b16 %v1329
    %v1428 = vunpack.c.l.b16 %v1330
    %v1429 = vunpack.c.l.b16 %v1331
    %v1430 = vunpack.c.l.b16 %v1332
    %v1431 = vunpack.c.l.b16 %v1333
    %v1432 = vunpack.c.l.b16 %v1334
    %v1433 = vunpack.c.l.b16 %v1335
    %v1434 = vunpack.c.l.b16 %v1336
    %v1435 = vunpack.c.l.b16 %v1337
    %v1436 = vunpack.c.l.b16 %v1338
    %v1437 = vunpack.c.l.b16 %v1339
    %v1438 = vunpack.c.l.b16 %v1340
    %v1439 = vunpack.c.l.b16 %v1341
    %v1440 = vunpack.c.l.b16 %v1342
    %v1441 = vunpack.c.l.b16 %v1343
    %v1442 = vunpack.c.l.b16 %v1344
    %v1443 = vunpack.c.l.b16 %v1345
    %v1444 = vunpack.c.l.b16 %v1346
    %v1445 = vunpack.c.l.b16 %v1347
    %v1446 = vunpack.c.l.b16 %v1348
    %v1447 = vunpack.c.l.b16 %v1349
    %v1448 = vunpack.c.l.b16 %v1350
    %v1449 = vunpack.c.l.b16 %v1351
    %v1450 = vunpack.c.l.b16 %v1352
    %v1451 = vunpack.c.l.b16 %v1353
    %v1452 = vunpack.c.l.b16 %v1354
    %v1453 = vunpack.c.l.b16 %v1355
    %v1454 = vunpack.c.l.b16 %v1356
    %v1455 = vunpack.c.l.b16 %v1357
    %v1456 = vunpack.c.l.b16 %v1358
    %v1457 = vunpack.c.l.b16 %v1359
    %v1458 = vunpack.c.l.b16 %v1360
    %v1459 = vunpack.c.l.b16 %v1361
    %v1460 = vunpack.c.l.b16 %v1362
    %v1461 = vpack.c.b16 %v1414, %v1413
    %v1462 = vpack.c.b16 %v1416, %v1415
    %v1463 = vpack.c.b16 %v1418, %v1417
    %v1464 = vpack.c.b16 %v1420, %v1419
    %v1465 = vpack.c.b16 %v1422, %v1421
    %v1466 = vpack.c.b16 %v1424, %v1423
    %v1467 = vpack.c.b16 %v1426, %v1425
    %v1468 = vpack.c.b16 %v1428, %v1427
    %v1469 = vpack.c.b16 %v1430, %v1429
    %v1470 = vpack.c.b16 %v1432, %v1431
    %v1471 = vpack.c.b16 %v1434, %v1433
    %v1472 = vpack.c.b16 %v1436, %v1435
    %v1473 = vpack.c.b16 %v1438, %v1437
    %v1474 = vpack.c.b16 %v1440, %v1439
    %v1475 = vpack.c.b16 %v1442, %v1441
    %v1476 = vpack.c.b16 %v1444, %v1443
    %v1477 = vpack.c.b16 %v1446, %v1445
    %v1478 = vpack.c.b16 %v1448, %v1447
    %v1479 = vpack.c.b16 %v1450, %v1449
    %v1480 = vpack.c.b16 %v1452, %v1451
    %v1481 = vpack.c.b16 %v1454, %v1453
    %v1482 = vpack.c.b16 %v1456, %v1455
    %v1483 = vpack.c.b16 %v1458, %v1457
    %v1484 = vpack.c.b16 %v1460, %v1459
    %1509 = vmatprep.subr.bf16.mxu0 0
    %1510 = vmatpush1.bf16.msra.mxu0 %v1461
    %1511 = vmatprep.subr.bf16.mxu0 0
    %1512 = vmatpush1.bf16.msra.mxu0 %v1462
    %1513 = vmatprep.subr.bf16.mxu0 0
    %1514 = vmatpush1.bf16.msra.mxu0 %v1463
    %1515 = vmatprep.subr.bf16.mxu0 0
    %1516 = vmatpush1.bf16.msra.mxu0 %v1464
    %1517 = vmatprep.subr.bf16.mxu0 0
    %1518 = vmatpush1.bf16.msra.mxu0 %v1465
    %1519 = vmatprep.subr.bf16.mxu0 0
    %1520 = vmatpush1.bf16.msra.mxu0 %v1466
    %1521 = vmatprep.subr.bf16.mxu0 0
    %1522 = vmatpush1.bf16.msra.mxu0 %v1467
    %1523 = vmatprep.subr.bf16.mxu0 0
    %1524 = vmatpush1.bf16.msra.mxu0 %v1468
    %1525 = vmatprep.subr.bf16.mxu0 0
    %1526 = vmatpush1.bf16.msra.mxu0 %v1469
    %1527 = vmatprep.subr.bf16.mxu0 0
    %1528 = vmatpush1.bf16.msra.mxu0 %v1470
    %1529 = vmatprep.subr.bf16.mxu0 0
    %1530 = vmatpush1.bf16.msra.mxu0 %v1471
    %1531 = vmatprep.subr.bf16.mxu0 0
    %1532 = vmatpush1.bf16.msra.mxu0 %v1472
    %1533 = vmatprep.subr.bf16.mxu0 0
    %1534 = vmatpush1.bf16.msra.mxu0 %v1473
    %1535 = vmatprep.subr.bf16.mxu0 0
    %1536 = vmatpush1.bf16.msra.mxu0 %v1474
    %1537 = vmatprep.subr.bf16.mxu0 0
    %1538 = vmatpush1.bf16.msra.mxu0 %v1475
    %1539 = vmatprep.subr.bf16.mxu0 0
    %1540 = vmatpush1.bf16.msra.mxu0 %v1476
    %1541 = vmatprep.mubr.bf16.mxu0 %v1313
    %1542 = vmatmul.mubr.bf16.gmra.mrb[0].mxu0 %v1312
    %v1543 = vpop.f32.mrb[0].mxu0
    %v1544 = vadd.f32 %v1364, %v1543
    %v1545 = vpop.f32.mrb[0].mxu0
    %v1546 = vpop.f32.mrb[0].mxu0
    %v1547 = vpop.f32.mrb[0].mxu0
    %1548 = vdwg.mxu0
    %1549 = vmatprep.subr.bf16.mxu0 0
    %1550 = vmatpush1.bf16.msra.mxu0 %v1477
    %1551 = vmatprep.subr.bf16.mxu0 0
    %1552 = vmatpush1.bf16.msra.mxu0 %v1478
    %1553 = vmatprep.subr.bf16.mxu0 0
    %1554 = vmatpush1.bf16.msra.mxu0 %v1479
    %1555 = vmatprep.subr.bf16.mxu0 0
    %1556 = vmatpush1.bf16.msra.mxu0 %v1480
    %1557 = vmatprep.subr.bf16.mxu0 0
    %1558 = vmatpush1.bf16.msra.mxu0 %v1481
    %1559 = vmatprep.subr.bf16.mxu0 0
    %1560 = vmatpush1.bf16.msra.mxu0 %v1482
    %1561 = vmatprep.subr.bf16.mxu0 0
    %1562 = vmatpush1.bf16.msra.mxu0 %v1483
    %1563 = vmatprep.subr.bf16.mxu0 0
    %1564 = vmatpush1.bf16.msra.mxu0 %v1484
    %1565 = vmatprep.subr.bf16.mxu0 0
    %1566 = vmatpush1.bf16.msra.mxu0 0
    %1567 = vmatprep.subr.bf16.mxu0 0
    %1568 = vmatpush1.bf16.msra.mxu0 0
    %1569 = vmatprep.subr.bf16.mxu0 0
    %1570 = vmatpush1.bf16.msra.mxu0 0
    %1571 = vmatprep.subr.bf16.mxu0 0
    %1572 = vmatpush1.bf16.msra.mxu0 0
    %1573 = vmatprep.subr.bf16.mxu0 0
    %1574 = vmatpush1.bf16.msra.mxu0 0
    %1575 = vmatprep.subr.bf16.mxu0 0
    %1576 = vmatpush1.bf16.msra.mxu0 0
    %1577 = vmatprep.subr.bf16.mxu0 0
    %1578 = vmatpush1.bf16.msra.mxu0 0
    %1579 = vmatprep.subr.bf16.mxu0 0
    %1580 = vmatpush1.bf16.msra.mxu0 0
    %1581 = vmatprep.mubr.bf16.mxu0 0
    %1582 = vmatmul.mubr.bf16.gmra.mrb[0].mxu0 %v1314
    %v1583 = vpop.f32.mrb[0].mxu0
    %v1584 = vadd.f32 %v1544, %v1583
    %v1585 = vpop.f32.mrb[0].mxu0
    %v1586 = vpop.f32.mrb[0].mxu0
    %v1587 = vpop.f32.mrb[0].mxu0
    %1588 = vdwg.mxu0
    %1589 = vst [vmem:[#allocation12] sm:$0xff] %v1584
    // Predicated region
    $region62: #{tpu_custom_call.1} parent=1 // pred_check
      _
    $region63: #{tpu_custom_call.1} parent=1 // pred_check_branch
      %1591 = sbr.rel (0) target = $region65
    $region64: #{tpu_custom_call.1} parent=1 // pred_region
      %s1593 = ssub.s32 128, 128
      %1594 = vsyncadd [#allocation5], %s1593
      %s1596 = sshll.u32 [#allocation12], 4
      %s1597 = int_to_ptr.vmem [resolvable:$true] %s1596
      %1599 = dma.vmem_to_hbm [thread:$0]  %s1597, 128, %s10, [#allocation5]
    $region65: #{tpu_custom_call.1} parent=1 // pred_fallthru
      _
    // Predicated region
    $region66: #{tpu_custom_call.1} parent=1 // pred_check
      _
    $region67: #{tpu_custom_call.1} parent=1 // pred_check_branch
      %1601 = sbr.rel (0) target = $region69
    $region68: #{tpu_custom_call.1} parent=1 // pred_region
      %1602 = dma.done [#allocation5], 128
    $region69: #{tpu_custom_call.1} parent=1 // pred_fallthru
      _
    %1603 = vsyncpa [#allocation4], 1
    %1604 = vsyncpa [#allocation7], 1
    %1605 = vsyncpa [#allocation10], 1
    %1606 = vsyncpa [#allocation5], 1

</llo_original>
